<compile_context>
chip_gen: v7x
topology: tpu7x:2x2x1
jax: 0.10.0
libtpu: 0.0.40
codegen_flags: <defaults>
</compile_context>

<pallas_src>
import functools

import jax
import jax.numpy as jnp
from jax import lax
from jax.experimental import pallas as pl
from jax.experimental.pallas import tpu as pltpu

LN_EPS = 1e-5


def _round_up(a: int, b: int) -> int:
    return (a + b - 1) // b * b


def _cdiv(a: int, b: int) -> int:
    return (a + b - 1) // b


def _vmem_capacity_bytes() -> int:
    try:
        return int(pltpu.get_tpu_info().vmem_capacity_bytes)
    except Exception:
        return 64 * 1024 * 1024  # conservative (v7x per-TensorCore size)


def _const_spec(shape, index_map):
    """BlockSpec for grid-invariant operands: single-buffered (no pointless
    double-buffering of a block that never changes)."""
    try:
        return pl.BlockSpec(shape, index_map, pipeline_mode=pl.Buffered(1))
    except TypeError:  # older BlockSpec signature without pipeline_mode
        return pl.BlockSpec(shape, index_map)


# ---------------------------------------------------------------------------
# Kernel bodies
# ---------------------------------------------------------------------------

def _ln_epilogue(acc_f32, params_f32, o_ref, *, do_norm, padded_cols, inv_n):
    """Bias add + optional LayerNorm.  params rows: 0=bias 1=gamma 2=beta 3=mask."""
    bias = params_f32[0:1, :]
    out = acc_f32 + bias
    if not do_norm:
        o_ref[...] = out.astype(o_ref.dtype)
        return
    gamma = params_f32[1:2, :]
    beta = params_f32[2:3, :]
    # Padded output columns of `out` are exactly 0 (zero weight cols, zero bias),
    # so the sum over the full padded width equals the sum over real columns.
    mean = jnp.sum(out, axis=-1, keepdims=True) * inv_n
    centered = out - mean
    if padded_cols:
        c = centered * params_f32[3:4, :]      # precomputed validity mask
    else:
        c = centered
    var = jnp.sum(c * c, axis=-1, keepdims=True) * inv_n
    inv = lax.rsqrt(var + LN_EPS)              # EUP slot
    # Fold gamma into inv-std before the full-tile multiply.
    o_ref[...] = (centered * (inv * gamma) + beta).astype(o_ref.dtype)


def _kernel_fused(x_ref, w_ref, p_ref, o_ref, *, do_norm, padded_cols, inv_n):
    """in_pad == 128: single K=256 MXU pass with lhs = [x | relu(x)] built
    in-register (no VMEM staging)."""
    x_tile = x_ref[...]
    relu_x = jnp.maximum(x_tile, jnp.zeros_like(x_tile))
    lhs = jnp.concatenate([x_tile, relu_x], axis=-1)   # lane-aligned 128|128
    acc = jnp.dot(lhs, w_ref[...], preferred_element_type=jnp.float32)
    _ln_epilogue(acc, p_ref[...].astype(jnp.float32), o_ref,
                 do_norm=do_norm, padded_cols=padded_cols, inv_n=inv_n)


def _kernel_two_dot(x_ref, wd_ref, wl_ref, p_ref, o_ref, *,
                    do_norm, padded_cols, inv_n):
    """General resident-weight path: two MXU dots, no scratch."""
    x_tile = x_ref[...]
    relu_x = jnp.maximum(x_tile, jnp.zeros_like(x_tile))
    acc = (jnp.dot(x_tile, wd_ref[...], preferred_element_type=jnp.float32)
           + jnp.dot(relu_x, wl_ref[...], preferred_element_type=jnp.float32))
    _ln_epilogue(acc, p_ref[...].astype(jnp.float32), o_ref,
                 do_norm=do_norm, padded_cols=padded_cols, inv_n=inv_n)


def _kernel_ktiled(x_ref, wd_ref, wl_ref, p_ref, o_ref, acc_ref, *,
                   do_norm, padded_cols, inv_n):
    """Fallback when the weight slab does not fit VMEM: reduce over K blocks
    with an f32 accumulator; epilogue on the last K step."""
    k = pl.program_id(1)

    @pl.when(k == 0)
    def _():
        acc_ref[...] = jnp.zeros_like(acc_ref)

    x_tile = x_ref[...]
    relu_x = jnp.maximum(x_tile, jnp.zeros_like(x_tile))
    acc_ref[...] += (
        jnp.dot(x_tile, wd_ref[...], preferred_element_type=jnp.float32)
        + jnp.dot(relu_x, wl_ref[...], preferred_element_type=jnp.float32))

    @pl.when(k == pl.num_programs(1) - 1)
    def _():
        _ln_epilogue(acc_ref[...], p_ref[...].astype(jnp.float32), o_ref,
                     do_norm=do_norm, padded_cols=padded_cols, inv_n=inv_n)


# ---------------------------------------------------------------------------
# Wrapper
# ---------------------------------------------------------------------------

def residual_block(x, w_direct, w_lin, b_lin, ln_gamma, ln_beta,
                   apply_final_norm=True, tile_m=512,
                   max_resident_weight_bytes=None):
    """x: (..., in_size). Weights in PyTorch layout: w_* is (out_size, in_size)."""
    orig_shape = x.shape
    in_size = orig_shape[-1]
    out_size = w_direct.shape[0]
    x2d = x.reshape(-1, in_size)
    n_rows = x2d.shape[0]

    # Lane-dense feature padding (multiples of 128).
    in_pad = _round_up(in_size, 128)
    out_pad = _round_up(out_size, 128)

    # Row tiling: multiple of 8, sized near n_rows / n_tiles to minimise
    # padding waste, >= 2 tiles when possible so both v7x TCs get work.
    tile_m = max(8, _round_up(int(tile_m), 8))
    min_tiles = 2 if n_rows > 8 else 1
    n_tiles = max(_cdiv(n_rows, tile_m), min_tiles)
    tile_rows = _round_up(_cdiv(n_rows, n_tiles), 8)
    n_row_tiles = _cdiv(n_rows, tile_rows)
    n_rows_pad = n_row_tiles * tile_rows

    if (n_rows_pad != n_rows) or (in_pad != in_size):
        x2d = jnp.pad(x2d, ((0, n_rows_pad - n_rows), (0, in_pad - in_size)))

    w_dtype = w_direct.dtype
    w_itemsize = jnp.dtype(w_dtype).itemsize
    x_itemsize = jnp.dtype(x2d.dtype).itemsize
    out_itemsize = jnp.dtype(x.dtype).itemsize

    # Padded, transposed weights (zero padding rows/cols -> zero contribution).
    wd = jnp.zeros((in_pad, out_pad), w_dtype).at[:in_size, :out_size].set(w_direct.T)
    wl = jnp.zeros((in_pad, out_pad), w_dtype).at[:in_size, :out_size].set(w_lin.T)

    # Packed constant slab: bias / gamma / beta / column-validity mask.
    params = jnp.zeros((4, out_pad), jnp.float32)
    params = params.at[0, :out_size].set(b_lin.astype(jnp.float32))
    params = params.at[1, :out_size].set(ln_gamma.astype(jnp.float32))
    params = params.at[2, :out_size].set(ln_beta.astype(jnp.float32))
    params = params.at[3, :out_size].set(1.0)

    do_norm = bool(apply_final_norm)
    padded_cols = out_pad != out_size
    inv_n = 1.0 / float(out_size)

    cap = _vmem_capacity_bytes()
    if max_resident_weight_bytes is None:
        max_resident_weight_bytes = cap // 2

    resident_w_bytes = 2 * in_pad * out_pad * w_itemsize
    use_ktiled = (resident_w_bytes > max_resident_weight_bytes) and in_pad > 128
    fused = (in_pad == 128) and not use_ktiled
    statics = dict(do_norm=do_norm, padded_cols=padded_cols, inv_n=inv_n)

    out_tile_bytes = 2 * tile_rows * out_pad * out_itemsize   # double-buffered out
    params_bytes = int(params.size) * 4

    if fused:
        # Single K=2*in_pad dot fills the 256-deep v6e/v7x MXU.
        w_fused = jnp.concatenate([wd, wl], axis=0)           # (2*in_pad, out_pad)
        kernel = functools.partial(_kernel_fused, **statics)
        grid = (n_row_tiles,)
        in_specs = [
            pl.BlockSpec((tile_rows, in_pad), lambda i: (i, 0)),
            _const_spec((2 * in_pad, out_pad), lambda i: (0, 0)),
            _const_spec((4, out_pad), lambda i: (0, 0)),
        ]
        args = (x2d, w_fused, params)
        out_spec = pl.BlockSpec((tile_rows, out_pad), lambda i: (i, 0))
        scratch = []
        dims = ("parallel",)
        need = (2 * tile_rows * in_pad * x_itemsize + out_tile_bytes
                + resident_w_bytes + params_bytes)
    elif not use_ktiled:
        kernel = functools.partial(_kernel_two_dot, **statics)
        grid = (n_row_tiles,)
        in_specs = [
            pl.BlockSpec((tile_rows, in_pad), lambda i: (i, 0)),
            _const_spec((in_pad, out_pad), lambda i: (0, 0)),
            _const_spec((in_pad, out_pad), lambda i: (0, 0)),
            _const_spec((4, out_pad), lambda i: (0, 0)),
        ]
        args = (x2d, wd, wl, params)
        out_spec = pl.BlockSpec((tile_rows, out_pad), lambda i: (i, 0))
        scratch = []
        dims = ("parallel",)
        need = (2 * tile_rows * in_pad * x_itemsize + out_tile_bytes
                + resident_w_bytes + params_bytes)
    else:
        # Pick the largest K block (multiple of 128 dividing in_pad) whose
        # double-buffered Wd+Wl blocks fit the weight budget.
        units = in_pad // 128
        tk = 128
        for d in range(units, 0, -1):
            if units % d:
                continue
            cand = d * 128
            if 2 * cand * out_pad * w_itemsize * 2 <= max_resident_weight_bytes:
                tk = cand
                break
        n_k = in_pad // tk
        kernel = functools.partial(_kernel_ktiled, **statics)
        grid = (n_row_tiles, n_k)                 # reduction axis last
        in_specs = [
            pl.BlockSpec((tile_rows, tk), lambda i, k: (i, k)),
            pl.BlockSpec((tk, out_pad), lambda i, k: (k, 0)),
            pl.BlockSpec((tk, out_pad), lambda i, k: (k, 0)),
            _const_spec((4, out_pad), lambda i, k: (0, 0)),
        ]
        args = (x2d, wd, wl, params)
        out_spec = pl.BlockSpec((tile_rows, out_pad), lambda i, k: (i, 0))
        scratch = [pltpu.VMEM((tile_rows, out_pad), jnp.float32)]
        dims = ("parallel", "arbitrary")
        need = (2 * tile_rows * tk * x_itemsize + out_tile_bytes
                + 2 * 2 * tk * out_pad * w_itemsize
                + tile_rows * out_pad * 4 + params_bytes)

    # VMEM limit: actual footprint + slack, clamped under physical capacity.
    vmem_limit = int(min(max(need + (4 << 20), 16 << 20),
                         max(cap - (8 << 20), 16 << 20)))

    # Advisory cost estimate (true, unpadded dims).
    cost = pl.CostEstimate(
        flops=4 * n_rows * in_size * out_size,
        transcendentals=n_rows if do_norm else 0,
        bytes_accessed=(n_rows * in_size * x_itemsize
                        + 2 * in_size * out_size * w_itemsize
                        + n_rows * out_size * out_itemsize
                        + params_bytes))

    out = pl.pallas_call(
        kernel,
        out_shape=jax.ShapeDtypeStruct((n_rows_pad, out_pad), x.dtype),
        grid=grid,
        in_specs=in_specs,
        out_specs=out_spec,
        scratch_shapes=scratch,
        compiler_params=pltpu.CompilerParams(
            dimension_semantics=dims,
            vmem_limit_bytes=vmem_limit),
        cost_estimate=cost,
    )(*args)

    out = out[:n_rows, :out_size]
    return out.reshape(orig_shape[:-1] + (out_size,))


# ---------------------------------------------------------------------------
# Reference + self-test
# ---------------------------------------------------------------------------

def _reference(x, w_direct, w_lin, b_lin, gamma, beta, apply_final_norm=True):
    direct = x @ w_direct.T
    h = jnp.maximum(x, 0.0) @ w_lin.T + b_lin
    out = h + direct
    if not apply_final_norm:
        return out
    mean = out.mean(-1, keepdims=True)
    var = ((out - mean) ** 2).mean(-1, keepdims=True)
    return (out - mean) / jnp.sqrt(var + LN_EPS) * gamma + beta


def _make_case(key, batch, seq, in_size, out_size):
    k_x, k_wd, k_wl, k_b, k_g, k_be = jax.random.split(key, 6)
    x = jax.random.normal(k_x, (batch, seq, in_size), jnp.float32)
    w_direct = jax.random.normal(k_wd, (out_size, in_size), jnp.float32) * 0.1
    w_lin = jax.random.normal(k_wl, (out_size, in_size), jnp.float32) * 0.1
    b_lin = jax.random.normal(k_b, (out_size,), jnp.float32) * 0.1
    gamma = 1.0 + 0.05 * jax.random.normal(k_g, (out_size,), jnp.float32)
    beta = 0.05 * jax.random.normal(k_be, (out_size,), jnp.float32)
    return x, w_direct, w_lin, b_lin, gamma, beta


if __name__ == "__main__":
    key = jax.random.PRNGKey(0)

    # Case 1: in_pad == 128 -> fused single-MXU-pass resident path (+ no-norm).
    args1 = _make_case(key, 2, 8, 32, 32)
    out1 = jax.block_until_ready(residual_block(*args1))
    ref1 = _reference(*args1)
    assert out1.shape == (2, 8, 32)
    assert jnp.allclose(out1, ref1, atol=1e-4, rtol=1e-4), "mismatch (fused, norm)"

    out1n = jax.block_until_ready(residual_block(*args1, apply_final_norm=False))
    ref1n = _reference(*args1, apply_final_norm=False)
    assert jnp.allclose(out1n, ref1n, atol=1e-4, rtol=1e-4), "mismatch (fused, no norm)"

    # Case 2: padded features, in_pad > 128 -> two-dot resident path.
    args2 = _make_case(jax.random.PRNGKey(1), 2, 12, 160, 96)
    out2 = jax.block_until_ready(residual_block(*args2))
    ref2 = _reference(*args2)
    assert out2.shape == (2, 12, 96)
    assert jnp.allclose(out2, ref2, atol=1e-4, rtol=1e-4), "mismatch (two-dot, norm)"

    # Case 3: force the K-tiled reduction fallback (weight slab "too big").
    out3 = jax.block_until_ready(
        residual_block(*args2, max_resident_weight_bytes=1))
    assert jnp.allclose(out3, ref2, atol=1e-4, rtol=1e-4), "mismatch (K-tiled, norm)"

    print("KERNEL_OK")
</pallas_src>

<mosaic_0001>
module attributes {stable_mosaic.version = 11 : i64} {
  func.func @_kernel_fused(%arg0: i32, %arg1: memref<8x128xf32, #tpu.memory_space<vmem>>, %arg2: memref<256x128xf32, #tpu.memory_space<vmem>>, %arg3: memref<4x128xf32, #tpu.memory_space<vmem>>, %arg4: memref<8x128xf32, #tpu.memory_space<vmem>>) attributes {dimension_semantics = [#tpu.dimension_semantics<parallel>], iteration_bounds = array<i64: 2>, scalar_prefetch = 0 : i64, scratch_operands = 0 : i64, tpu.core_type = #tpu.core_type<tc>, window_params = [{transform_indices = @transform_0, window_bounds = array<i64: 8, 128>}, {pipeline_mode = #tpu.pipeline_mode<synchronous>, transform_indices = @transform_1, window_bounds = array<i64: 256, 128>}, {pipeline_mode = #tpu.pipeline_mode<synchronous>, transform_indices = @transform_2, window_bounds = array<i64: 4, 128>}, {transform_indices = @transform_3, window_bounds = array<i64: 8, 128>}]} {
    %c0 = arith.constant 0 : index
    %c0_0 = arith.constant 0 : index
    %0 = vector.load %arg1[%c0, %c0_0] : memref<8x128xf32, #tpu.memory_space<vmem>>, vector<8x128xf32>
    %cst = arith.constant 0.000000e+00 : f32
    %1 = vector.broadcast %cst : f32 to vector<8x128xf32>
    %2 = arith.maximumf %0, %1 : vector<8x128xf32>
    %3 = tpu.concatenate %0, %2 in 1 : vector<8x128xf32>, vector<8x128xf32> -> vector<8x256xf32>
    %c0_1 = arith.constant 0 : index
    %c0_2 = arith.constant 0 : index
    %4 = vector.load %arg2[%c0_1, %c0_2] : memref<256x128xf32, #tpu.memory_space<vmem>>, vector<256x128xf32>
    %cst_3 = arith.constant dense<0.000000e+00> : vector<8x128xf32>
    %5 = tpu.matmul %3, %4, %cst_3 {dimension_numbers = #tpu.dot_dimension_numbers<[1], [0], [0], [1], [0, 0, 1, 1], [], []>} : vector<8x256xf32>, vector<256x128xf32>, vector<8x128xf32> -> vector<8x128xf32>
    %c0_4 = arith.constant 0 : index
    %c0_5 = arith.constant 0 : index
    %6 = vector.load %arg3[%c0_4, %c0_5] : memref<4x128xf32, #tpu.memory_space<vmem>>, vector<4x128xf32>
    %7 = vector.extract_strided_slice %6 {offsets = [0, 0], sizes = [1, 128], strides = [1, 1]} : vector<4x128xf32> to vector<1x128xf32>
    %8 = vector.broadcast %7 : vector<1x128xf32> to vector<8x128xf32>
    %9 = arith.addf %5, %8 : vector<8x128xf32>
    %10 = vector.extract_strided_slice %6 {offsets = [1, 0], sizes = [1, 128], strides = [1, 1]} : vector<4x128xf32> to vector<1x128xf32>
    %11 = vector.extract_strided_slice %6 {offsets = [2, 0], sizes = [1, 128], strides = [1, 1]} : vector<4x128xf32> to vector<1x128xf32>
    %cst_6 = arith.constant dense<0.000000e+00> : vector<8xf32>
    %12 = vector.multi_reduction <add>, %9, %cst_6 [1] : vector<8x128xf32> to vector<8xf32>
    %13 = vector.shape_cast %12 : vector<8xf32> to vector<8x1xf32>
    %cst_7 = arith.constant 3.125000e-02 : f32
    %14 = vector.broadcast %cst_7 : f32 to vector<8x1xf32>
    %15 = arith.mulf %13, %14 : vector<8x1xf32>
    %16 = vector.broadcast %15 : vector<8x1xf32> to vector<8x128xf32>
    %17 = arith.subf %9, %16 : vector<8x128xf32>
    %18 = vector.extract_strided_slice %6 {offsets = [3, 0], sizes = [1, 128], strides = [1, 1]} : vector<4x128xf32> to vector<1x128xf32>
    %19 = vector.broadcast %18 : vector<1x128xf32> to vector<8x128xf32>
    %20 = arith.mulf %17, %19 : vector<8x128xf32>
    %21 = arith.mulf %20, %20 : vector<8x128xf32>
    %cst_8 = arith.constant dense<0.000000e+00> : vector<8xf32>
    %22 = vector.multi_reduction <add>, %21, %cst_8 [1] : vector<8x128xf32> to vector<8xf32>
    %23 = vector.shape_cast %22 : vector<8xf32> to vector<8x1xf32>
    %cst_9 = arith.constant 3.125000e-02 : f32
    %24 = vector.broadcast %cst_9 : f32 to vector<8x1xf32>
    %25 = arith.mulf %23, %24 : vector<8x1xf32>
    %cst_10 = arith.constant 9.99999974E-6 : f32
    %26 = vector.broadcast %cst_10 : f32 to vector<8x1xf32>
    %27 = arith.addf %25, %26 : vector<8x1xf32>
    %28 = math.rsqrt %27 : vector<8x1xf32>
    %29 = vector.broadcast %28 : vector<8x1xf32> to vector<8x128xf32>
    %30 = vector.broadcast %10 : vector<1x128xf32> to vector<8x128xf32>
    %31 = arith.mulf %29, %30 : vector<8x128xf32>
    %32 = arith.mulf %17, %31 : vector<8x128xf32>
    %33 = vector.broadcast %11 : vector<1x128xf32> to vector<8x128xf32>
    %34 = arith.addf %32, %33 : vector<8x128xf32>
    %c0_11 = arith.constant 0 : index
    %c0_12 = arith.constant 0 : index
    %35 = vector.load %arg4[%c0_11, %c0_12] : memref<8x128xf32, #tpu.memory_space<vmem>>, vector<8x128xf32>
    tpu.vector_store %arg4[%c0_11, %c0_12], %34 {strides = array<i32>} : memref<8x128xf32, #tpu.memory_space<vmem>>, vector<8x128xf32>,
    return
  }
  func.func @transform_0(%arg0: i32) -> (i32, i32) {
    %c0_i32 = arith.constant 0 : i32
    %c0_i32_0 = arith.constant 0 : i32
    return %arg0, %c0_i32 : i32, i32
  }
  func.func @transform_1(%arg0: i32) -> (i32, i32) {
    %c0_i32 = arith.constant 0 : i32
    %c0_i32_0 = arith.constant 0 : i32
    %c0_i32_1 = arith.constant 0 : i32
    return %c0_i32, %c0_i32_0 : i32, i32
  }
  func.func @transform_2(%arg0: i32) -> (i32, i32) {
    %c0_i32 = arith.constant 0 : i32
    %c0_i32_0 = arith.constant 0 : i32
    %c0_i32_1 = arith.constant 0 : i32
    return %c0_i32, %c0_i32_0 : i32, i32
  }
  func.func @transform_3(%arg0: i32) -> (i32, i32) {
    %c0_i32 = arith.constant 0 : i32
    %c0_i32_0 = arith.constant 0 : i32
    return %arg0, %c0_i32 : i32, i32
  }
}

</mosaic_0001>

<llo_original>
// kernel: tpu_custom_call.1
$region0: #{tpu_custom_call.1}
  #allocation0 [shape = 'u32[]', space=smem, size = 0x4, offset = 0x4, fixed_abs, tag = 'smem constant byte address 0x4 - core index']
  #allocation1 [shape = 'u32[144,128]{1,0:T(1,128)}', space=vmem, size = 0x12000, scoped, tag = 'internal scratch']
  %s0 = inlined_call_operand.hbm [shape: f32[16,128], index: 0, kind: input, shape index: {}]
  %s1 = inlined_call_operand.hbm [shape: f32[256,128], index: 1, kind: input, shape index: {}]
  %s2 = inlined_call_operand.vmem [shape: f32[4,128], index: 2, kind: input, shape index: {}]
  %s3 = inlined_call_operand.hbm [shape: f32[16,128], index: 3, kind: output, shape index: {}]
  %s4 = sld [smem:[#allocation0]]
  $region53: #{tpu_custom_call.1} parent=0
    _
  %s6 = ssub.s32 1, %s4
  %s7 = scalar_select 0, %s6, %s4
  $region1: #{tpu_custom_call.1} parent=0
    #allocation2 [shape = 'u8[8192]{0}', space=vmem, size = 0x2000, scoped, tag = 'input window, operand 0']
    #allocation3 [shape = 's32[2]{0}', space=sflag, size = 0x8, scoped, tag = 'scoped memory for tpu_custom_call.1']
    #allocation4 [shape = 's32[2]{0}', space=sflag, size = 0x8, scoped, tag = 'scoped memory for tpu_custom_call.1']
    #allocation5 [shape = 'u8[131072]{0}', space=vmem, size = 0x20000, scoped, tag = 'input window, operand 1, single buffered']
    #allocation6 [shape = 's32[1]{0}', space=sflag, size = 0x4, scoped, tag = 'scoped memory for tpu_custom_call.1']
    #allocation7 [shape = 'u8[8192]{0}', space=vmem, size = 0x2000, scoped, tag = 'output window, operand 0']
    %8 = vsyncpa [#allocation3], 0
    %s9 = scalar_lea.sflag [#allocation3], 1
    %10 = vsyncpa %s9, 0
    %11 = vsyncpa [#allocation6], 0
    %12 = vsyncpa [#allocation4], 0
    %s13 = scalar_lea.sflag [#allocation4], 1
    %14 = vsyncpa %s13, 0
    loop: start=0, step=1, limit=4
    $region2: #{tpu_custom_call.1} parent=1 // loop_pre_header
      _
    $region3: #{tpu_custom_call.1} parent=1 // loop_header
      %s16 = sphi 0, %s20
      %p17 = scmp.ge.s32.totalorder %s16, 4
      %s26 = sphi 0, %s28
      %s29 = sphi 0, %s26
      %s30 = sphi 0, %s29
      %s46 = sphi 0, %s30
      %s50 = sphi 0, %s50
      %s52 = sphi 0, %s50
      %s53 = sphi 0, %s52
      %s67 = sphi 0, %s53
      %s71 = sphi 0, %s71
      %s73 = sphi 0, %s71
      %s74 = sphi 0, %s73
      %s88 = sphi 0, %s74
      %s94 = sphi 0, %s96
      %s97 = sphi 0, %s94
      %s98 = sphi 0, %s97
      %s114 = sphi 0, %s98
    $region4: #{tpu_custom_call.1} parent=1 // loop_header_branch
      %19 = sbr.rel (%p17) target = $region8
    $region5: #{tpu_custom_call.1} parent=1 // loop_body
      %s21 = ssub.s32 %s16, 1
      %s22 = ssub.s32 %s16, 2
      %s23 = sadd.s32 %s16, 1
      %s24 = ssub.s32 %s16, %s23
      %p25 = scmp.eq.s32.totalorder %s24, 0
      %s27 = sadd.s32 %s26, 1
      %s28 = scalar_select %p25, %s26, %s27
      %p31 = pneg %p25
      %p32 = scmp.eq.s32.totalorder %s16, 1
      %p33 = por %p31, %p32
      %p34 = scmp.ne.s32.totalorder %s26, %s29
      %p35 = scmp.eq.s32.totalorder %s16, 0
      %p36 = por %p34, %p35
      %p37 = scmp.ne.s32.totalorder %s26, %s29
      %p38 = scmp.eq.s32.totalorder %s21, 1
      %p39 = por %p37, %p38
      %p40 = scmp.ne.s32.totalorder %s29, %s30
      %p41 = scmp.eq.s32.totalorder %s21, 0
      %p42 = por %p40, %p41
      %p43 = scmp.ne.s32.totalorder %s29, %s30
      %p44 = scmp.eq.s32.totalorder %s22, 1
      %p45 = por %p43, %p44
      %p47 = scmp.ne.s32.totalorder %s30, %s46
      %p48 = scmp.eq.s32.totalorder %s22, 0
      %p49 = por %p47, %p48
      %s51 = sadd.s32 %s50, 1
      %p54 = scmp.eq.s32.totalorder %s16, 1
      %p55 = scmp.ne.s32.totalorder %s50, %s52
      %p56 = scmp.eq.s32.totalorder %s16, 0
      %p57 = por %p55, %p56
      %p58 = scmp.ne.s32.totalorder %s50, %s52
      %p59 = scmp.eq.s32.totalorder %s21, 1
      %p60 = por %p58, %p59
      %p61 = scmp.ne.s32.totalorder %s52, %s53
      %p62 = scmp.eq.s32.totalorder %s21, 0
      %p63 = por %p61, %p62
      %p64 = scmp.ne.s32.totalorder %s52, %s53
      %p65 = scmp.eq.s32.totalorder %s22, 1
      %p66 = por %p64, %p65
      %p68 = scmp.ne.s32.totalorder %s53, %s67
      %p69 = scmp.eq.s32.totalorder %s22, 0
      %p70 = por %p68, %p69
      %s72 = sadd.s32 %s71, 1
      %p75 = scmp.eq.s32.totalorder %s16, 1
      %p76 = scmp.ne.s32.totalorder %s71, %s73
      %p77 = scmp.eq.s32.totalorder %s16, 0
      %p78 = por %p76, %p77
      %p79 = scmp.ne.s32.totalorder %s71, %s73
      %p80 = scmp.eq.s32.totalorder %s21, 1
      %p81 = por %p79, %p80
      %p82 = scmp.ne.s32.totalorder %s73, %s74
      %p83 = scmp.eq.s32.totalorder %s21, 0
      %p84 = por %p82, %p83
      %p85 = scmp.ne.s32.totalorder %s73, %s74
      %p86 = scmp.eq.s32.totalorder %s22, 1
      %p87 = por %p85, %p86
      %p89 = scmp.ne.s32.totalorder %s74, %s88
      %p90 = scmp.eq.s32.totalorder %s22, 0
      %p91 = por %p89, %p90
      %s92 = ssub.s32 %s16, %s23
      %p93 = scmp.eq.s32.totalorder %s92, 0
      %s95 = sadd.s32 %s94, 1
      %s96 = scalar_select %p93, %s94, %s95
      %p99 = pneg %p93
      %p100 = scmp.eq.s32.totalorder %s16, 1
      %p101 = por %p99, %p100
      %p102 = scmp.ne.s32.totalorder %s94, %s97
      %p103 = scmp.eq.s32.totalorder %s16, 0
      %p104 = por %p102, %p103
      %p105 = scmp.ne.s32.totalorder %s94, %s97
      %p106 = scmp.eq.s32.totalorder %s21, 1
      %p107 = por %p105, %p106
      %p108 = scmp.ne.s32.totalorder %s97, %s98
      %p109 = scmp.eq.s32.totalorder %s21, 0
      %p110 = por %p108, %p109
      %p111 = scmp.ne.s32.totalorder %s97, %s98
      %p112 = scmp.eq.s32.totalorder %s22, 1
      %p113 = por %p111, %p112
      %p115 = scmp.ne.s32.totalorder %s98, %s114
      %p116 = scmp.eq.s32.totalorder %s22, 0
      %p117 = por %p115, %p116
      %p118 = scmp.le.s32.totalorder 1, %s16
      %p119 = scmp.lt.s32.totalorder %s16, 3
      %p120 = pnand %p118, %p119
      %p121 = pneg %p120
      // Predicated region
      $region9: #{tpu_custom_call.1} parent=5 // pred_check
        _
      $region10: #{tpu_custom_call.1} parent=5 // pred_check_branch
        %123 = sbr.rel (%p120) target = $region12
      $region11: #{tpu_custom_call.1} parent=5 // pred_region
        %s124 = ssub.s32 %s16, 1
        // Predicated region
        $region13: #{tpu_custom_call.1} parent=11 // pred_check
          %p125 = pneg %p63
        $region14: #{tpu_custom_call.1} parent=11 // pred_check_branch
          %127 = sbr.rel (%p125) target = $region16
        $region15: #{tpu_custom_call.1} parent=11 // pred_region
          %s129 = ssub.s32 4096, 4096
          %130 = vsyncadd [#allocation6], %s129
          %s131 = sshll.u32 [#allocation5], 4
          %s132 = int_to_ptr.vmem [resolvable:$true] %s131
          %137 = dma.hbm_to_vmem [thread:$0]  %s1, 4096, %s132, [#allocation6], 128, 128, 8
        $region16: #{tpu_custom_call.1} parent=11 // pred_fallthru
          _
        // Predicated region
        $region17: #{tpu_custom_call.1} parent=11 // pred_check
          %p138 = pneg %p84
        $region18: #{tpu_custom_call.1} parent=11 // pred_check_branch
          %140 = sbr.rel (%p138) target = $region20
        $region19: #{tpu_custom_call.1} parent=11 // pred_region
          _
        $region20: #{tpu_custom_call.1} parent=11 // pred_fallthru
          _
      $region12: #{tpu_custom_call.1} parent=5 // pred_fallthru
        _
      %p141 = scmp.lt.s32.totalorder %s16, 2
      // Predicated region
      $region21: #{tpu_custom_call.1} parent=5 // pred_check
        %p142 = pneg %p141
      $region22: #{tpu_custom_call.1} parent=5 // pred_check_branch
        %144 = sbr.rel (%p142) target = $region24
      $region23: #{tpu_custom_call.1} parent=5 // pred_region
        // Predicated region
        $region25: #{tpu_custom_call.1} parent=23 // pred_check
          %p145 = pneg %p36
        $region26: #{tpu_custom_call.1} parent=23 // pred_check_branch
          %147 = sbr.rel (%p145) target = $region28
        $region27: #{tpu_custom_call.1} parent=23 // pred_region
          %s148 = sand.u32 %s26, 1
          %s149 = scalar_lea.sflag [#allocation3], %s148
          %s150 = sand.u32 %s26, 1
          %s151 = smul.addr %s150, 8
          %s152 = scalar_lea.vmem [#allocation2], %s151
          %s154 = ssub.s32 128, 128
          %155 = vsyncadd %s149, %s154
          %s156 = smul.addr %s16, 128
          %s157 = scalar_lea.hbm %s0, %s156
          %s159 = sshll.u32 %s152, 4
          %s160 = int_to_ptr.vmem [resolvable:$true] %s159
          %162 = dma.hbm_to_vmem [thread:$0]  %s157, 128, %s160, %s149
        $region28: #{tpu_custom_call.1} parent=23 // pred_fallthru
          _
      $region24: #{tpu_custom_call.1} parent=5 // pred_fallthru
        _
      %p163 = scmp.le.s32.totalorder 1, %s16
      %p164 = scmp.lt.s32.totalorder %s16, 3
      %p165 = pnand %p163, %p164
      %p166 = pneg %p165
      // Predicated region
      $region29: #{tpu_custom_call.1} parent=5 // pred_check
        _
      $region30: #{tpu_custom_call.1} parent=5 // pred_check_branch
        %168 = sbr.rel (%p165) target = $region32
      $region31: #{tpu_custom_call.1} parent=5 // pred_region
        %s169 = ssub.s32 %s16, 1
        %s170 = sand.u32 %s29, 1
        %s171 = scalar_lea.sflag [#allocation3], %s170
        %s172 = sand.u32 %s29, 1
        %s173 = smul.addr %s172, 8
        %s174 = scalar_lea.vmem [#allocation2], %s173
        // Predicated region
        $region33: #{tpu_custom_call.1} parent=31 // pred_check
          %p175 = pneg %p42
        $region34: #{tpu_custom_call.1} parent=31 // pred_check_branch
          %177 = sbr.rel (%p175) target = $region36
        $region35: #{tpu_custom_call.1} parent=31 // pred_region
          %178 = dma.done %s171, 128
        $region36: #{tpu_custom_call.1} parent=31 // pred_fallthru
          _
        // Predicated region
        $region37: #{tpu_custom_call.1} parent=31 // pred_check
          %p179 = pneg %p63
        $region38: #{tpu_custom_call.1} parent=31 // pred_check_branch
          %181 = sbr.rel (%p179) target = $region40
        $region39: #{tpu_custom_call.1} parent=31 // pred_region
          %182 = dma.done [#allocation6], 4096
        $region40: #{tpu_custom_call.1} parent=31 // pred_fallthru
          _
        %s183 = sand.u32 %s29, 1
        %s184 = scalar_lea.sflag [#allocation3], %s183
        %s185 = sand.u32 %s29, 1
        %s186 = smul.addr %s185, 8
        %s187 = scalar_lea.vmem [#allocation2], %s186
        %p188 = pneg %p42
        %p189 = pneg %p39
        %p190 = pneg %p63
        %p191 = pneg %p60
        %p192 = pneg %p84
        %p193 = pneg %p81
        %p194 = pneg %p110
        %p195 = pneg %p107
        %s196 = sand.u32 %s97, 1
        %s197 = scalar_lea.sflag [#allocation4], %s196
        %s198 = sand.u32 %s97, 1
        %s199 = smul.addr %s198, 8
        %s200 = scalar_lea.vmem [#allocation7], %s199
        %v201 = vld [vmem:[%s174] sm:$0xff]
        %v202 = vmax.f32 %v201, 0.0
        %v203 = vld [vmem:[#allocation5] sm:$0xff]
        %v204 = vld [vmem:[#allocation5 + $0x8] sm:$0xff]
        %v205 = vld [vmem:[#allocation5 + $0x10] sm:$0xff]
        %v206 = vld [vmem:[#allocation5 + $0x18] sm:$0xff]
        %v207 = vld [vmem:[#allocation5 + $0x20] sm:$0xff]
        %v208 = vld [vmem:[#allocation5 + $0x28] sm:$0xff]
        %v209 = vld [vmem:[#allocation5 + $0x30] sm:$0xff]
        %v210 = vld [vmem:[#allocation5 + $0x38] sm:$0xff]
        %v211 = vld [vmem:[#allocation5 + $0x40] sm:$0xff]
        %v212 = vld [vmem:[#allocation5 + $0x48] sm:$0xff]
        %v213 = vld [vmem:[#allocation5 + $0x50] sm:$0xff]
        %v214 = vld [vmem:[#allocation5 + $0x58] sm:$0xff]
        %v215 = vld [vmem:[#allocation5 + $0x60] sm:$0xff]
        %v216 = vld [vmem:[#allocation5 + $0x68] sm:$0xff]
        %v217 = vld [vmem:[#allocation5 + $0x70] sm:$0xff]
        %v218 = vld [vmem:[#allocation5 + $0x78] sm:$0xff]
        %v219 = vld [vmem:[#allocation5 + $0x80] sm:$0xff]
        %v220 = vld [vmem:[#allocation5 + $0x88] sm:$0xff]
        %v221 = vld [vmem:[#allocation5 + $0x90] sm:$0xff]
        %v222 = vld [vmem:[#allocation5 + $0x98] sm:$0xff]
        %v223 = vld [vmem:[#allocation5 + $0xa0] sm:$0xff]
        %v224 = vld [vmem:[#allocation5 + $0xa8] sm:$0xff]
        %v225 = vld [vmem:[#allocation5 + $0xb0] sm:$0xff]
        %v226 = vld [vmem:[#allocation5 + $0xb8] sm:$0xff]
        %v227 = vld [vmem:[#allocation5 + $0xc0] sm:$0xff]
        %v228 = vld [vmem:[#allocation5 + $0xc8] sm:$0xff]
        %v229 = vld [vmem:[#allocation5 + $0xd0] sm:$0xff]
        %v230 = vld [vmem:[#allocation5 + $0xd8] sm:$0xff]
        %v231 = vld [vmem:[#allocation5 + $0xe0] sm:$0xff]
        %v232 = vld [vmem:[#allocation5 + $0xe8] sm:$0xff]
        %v233 = vld [vmem:[#allocation5 + $0xf0] sm:$0xff]
        %v234 = vld [vmem:[#allocation5 + $0xf8] sm:$0xff]
        %v235 = vld [vmem:[%s2] sm:$0xf]
        %v236 = vlaneseq
        %v237 = vshrl.u32 %v236, 7
        %v238 = vsub.s32 0, %v237
        %v239 = vrot.slane %v235, %v238
        %240 = vmatprep.subr.mxu0 0.0
        %241 = vmatpush1.msra.mxu0 %v203
        %242 = vmatprep.subr.mxu0 0.0
        %243 = vmatpush1.msra.mxu0 %v204
        %244 = vmatprep.subr.mxu0 0.0
        %245 = vmatpush1.msra.mxu0 %v205
        %246 = vmatprep.subr.mxu0 0.0
        %247 = vmatpush1.msra.mxu0 %v206
        %248 = vmatprep.subr.mxu0 0.0
        %249 = vmatpush1.msra.mxu0 %v207
        %250 = vmatprep.subr.mxu0 0.0
        %251 = vmatpush1.msra.mxu0 %v208
        %252 = vmatprep.subr.mxu0 0.0
        %253 = vmatpush1.msra.mxu0 %v209
        %254 = vmatprep.subr.mxu0 0.0
        %255 = vmatpush1.msra.mxu0 %v210
        %256 = vmatprep.subr.mxu0 0.0
        %257 = vmatpush1.msra.mxu0 %v211
        %258 = vmatprep.subr.mxu0 0.0
        %259 = vmatpush1.msra.mxu0 %v212
        %260 = vmatprep.subr.mxu0 0.0
        %261 = vmatpush1.msra.mxu0 %v213
        %262 = vmatprep.subr.mxu0 0.0
        %263 = vmatpush1.msra.mxu0 %v214
        %264 = vmatprep.subr.mxu0 0.0
        %265 = vmatpush1.msra.mxu0 %v215
        %266 = vmatprep.subr.mxu0 0.0
        %267 = vmatpush1.msra.mxu0 %v216
        %268 = vmatprep.subr.mxu0 0.0
        %269 = vmatpush1.msra.mxu0 %v217
        %270 = vmatprep.subr.mxu0 0.0
        %271 = vmatpush1.msra.mxu0 %v218
        %272 = vmatprep.subr.mxu0 0.0
        %273 = vmatpush1.msra.mxu0 %v219
        %274 = vmatprep.subr.mxu0 0.0
        %275 = vmatpush1.msra.mxu0 %v220
        %276 = vmatprep.subr.mxu0 0.0
        %277 = vmatpush1.msra.mxu0 %v221
        %278 = vmatprep.subr.mxu0 0.0
        %279 = vmatpush1.msra.mxu0 %v222
        %280 = vmatprep.subr.mxu0 0.0
        %281 = vmatpush1.msra.mxu0 %v223
        %282 = vmatprep.subr.mxu0 0.0
        %283 = vmatpush1.msra.mxu0 %v224
        %284 = vmatprep.subr.mxu0 0.0
        %285 = vmatpush1.msra.mxu0 %v225
        %286 = vmatprep.subr.mxu0 0.0
        %287 = vmatpush1.msra.mxu0 %v226
        %288 = vmatprep.subr.mxu0 0.0
        %289 = vmatpush1.msra.mxu0 %v227
        %290 = vmatprep.subr.mxu0 0.0
        %291 = vmatpush1.msra.mxu0 %v228
        %292 = vmatprep.subr.mxu0 0.0
        %293 = vmatpush1.msra.mxu0 %v229
        %294 = vmatprep.subr.mxu0 0.0
        %295 = vmatpush1.msra.mxu0 %v230
        %296 = vmatprep.subr.mxu0 0.0
        %297 = vmatpush1.msra.mxu0 %v231
        %298 = vmatprep.subr.mxu0 0.0
        %299 = vmatpush1.msra.mxu0 %v232
        %300 = vmatprep.subr.mxu0 0.0
        %301 = vmatpush1.msra.mxu0 %v233
        %302 = vmatprep.subr.mxu0 0.0
        %303 = vmatpush1.msra.mxu0 %v234
        %304 = vmatprep.mubr.f32.mxu0 %v202
        %305 = vmatmul.mubr.f32.gmra.mrb[0].mxu0 %v201
        %v306 = vpop.f32.mrb[0].mxu0
        %v307 = vadd.f32 %v239, %v306
        %v308 = vpop.f32.mrb[0].mxu0
        %309 = vdwg.mxu0
        %310 = vadd.xlane.f32.xlu0 %v307
        %v311 = vpop.xlane.xlu0 %310
        %v312 = vmul.f32 %v311, 0.03125
        %v313 = vsub.f32 %v307, %v312
        %v314 = vlaneseq
        %v315 = vshrl.u32 %v314, 7
        %v316 = vsub.s32 3, %v315
        %v317 = vrot.slane %v235, %v316
        %v318 = vmul.f32 %v313, %v317
        %v319 = vmul.f32 %v318, %v318
        %320 = vadd.xlane.f32.xlu0 %v319
        %v321 = vpop.xlane.xlu0 %320
        %v322 = vmul.f32 %v321, 0.03125
        %v323 = vadd.f32 %v322, 1e-05
        %v324 = vrsqrt.pop %v323
        %v325 = vlaneseq
        %v326 = vshrl.u32 %v325, 7
        %v327 = vsub.s32 1, %v326
        %v328 = vrot.slane %v235, %v327
        %v329 = vmul.f32 %v324, %v328
        %v330 = vmul.f32 %v313, %v329
        %v331 = vlaneseq
        %v332 = vshrl.u32 %v331, 7
        %v333 = vsub.s32 2, %v332
        %v334 = vrot.slane %v235, %v333
        %v335 = vadd.f32 %v330, %v334
        %336 = vst [vmem:[%s200] sm:$0xff] %v335
        %s337 = sand.u32 %s97, 1
        %s338 = scalar_lea.sflag [#allocation4], %s337
        %s339 = sand.u32 %s97, 1
        %s340 = smul.addr %s339, 8
        %s341 = scalar_lea.vmem [#allocation7], %s340
        // Predicated region
        $region41: #{tpu_custom_call.1} parent=31 // pred_check
          %p342 = pneg %p107
        $region42: #{tpu_custom_call.1} parent=31 // pred_check_branch
          %344 = sbr.rel (%p342) target = $region44
        $region43: #{tpu_custom_call.1} parent=31 // pred_region
          %s346 = ssub.s32 128, 128
          %347 = vsyncadd %s338, %s346
          %s348 = smul.addr %s21, 128
          %s349 = scalar_lea.hbm %s3, %s348
          %s351 = sshll.u32 %s341, 4
          %s352 = int_to_ptr.vmem [resolvable:$true] %s351
          %354 = dma.vmem_to_hbm [thread:$0]  %s352, 128, %s349, %s338
        $region44: #{tpu_custom_call.1} parent=31 // pred_fallthru
          _
      $region32: #{tpu_custom_call.1} parent=5 // pred_fallthru
        _
      %p355 = scmp.le.s32.totalorder 2, %s16
      // Predicated region
      $region45: #{tpu_custom_call.1} parent=5 // pred_check
        %p356 = pneg %p355
      $region46: #{tpu_custom_call.1} parent=5 // pred_check_branch
        %358 = sbr.rel (%p356) target = $region48
      $region47: #{tpu_custom_call.1} parent=5 // pred_region
        %s359 = ssub.s32 %s16, 2
        // Predicated region
        $region49: #{tpu_custom_call.1} parent=47 // pred_check
          %p360 = pneg %p113
        $region50: #{tpu_custom_call.1} parent=47 // pred_check_branch
          %362 = sbr.rel (%p360) target = $region52
        $region51: #{tpu_custom_call.1} parent=47 // pred_region
          %s363 = sand.u32 %s98, 1
          %s364 = scalar_lea.sflag [#allocation4], %s363
          %s365 = sand.u32 %s98, 1
          %s366 = smul.addr %s365, 8
          %s367 = scalar_lea.vmem [#allocation7], %s366
          %368 = dma.done %s364, 128
        $region52: #{tpu_custom_call.1} parent=47 // pred_fallthru
          _
      $region48: #{tpu_custom_call.1} parent=5 // pred_fallthru
        _
    $region6: #{tpu_custom_call.1} parent=1 // loop_footer
      %s20 = sadd.s32 1, %s16
    $region7: #{tpu_custom_call.1} parent=1 // loop_footer_branch
      %15 = sbr.rel target = $region3
    $region8: #{tpu_custom_call.1} parent=1 // loop_exit
      _
    %369 = vsyncpa [#allocation3], 1
    %s370 = scalar_lea.sflag [#allocation3], 1
    %371 = vsyncpa %s370, 1
    %372 = vsyncpa [#allocation6], 1
    %373 = vsyncpa [#allocation4], 1
    %s374 = scalar_lea.sflag [#allocation4], 1
    %375 = vsyncpa %s374, 1

</llo_original>
